<compile_context>
chip_gen: v6e
topology: v6e:2x2x1
jax: 0.10.0
libtpu: 0.0.40
codegen_flags: <defaults>
</compile_context>

<pallas_src>
import functools
import math

import jax
import jax.numpy as jnp
from jax.experimental import pallas as pl
from jax.experimental.pallas import tpu as pltpu

# Deterministic "hyperparameter" of the committee's shared RBF kernel.
SIGNAL_VARIANCE = 1.5  # diag(K_rbf(x_new, x_new)) == signal variance (constant)

# VMEM budget (bytes) for the double-buffered input/output blocks of one step.
_VMEM_BUDGET_BYTES = 24 << 20
# Below this total-input-bytes threshold we always run a single grid step
# (per-step launch/pipeline overhead dominates, splitting buys nothing).
_SMALL_PROBLEM_BYTES = 2 << 20


def _num_tensorcores():
    """Best-effort TensorCore-per-device count (2 on v7x, 1 on v5e/v6e).

    Purely a performance hint for the step-splitting policy; any failure
    falls back to 1 (correct everywhere)."""
    try:
        info = pltpu.get_tpu_info()
        for attr in ("num_cores", "core_count", "tensorcore_count",
                     "num_tensorcores"):
            v = getattr(info, attr, None)
            if isinstance(v, int) and v > 0:
                return v
    except Exception:
        pass
    try:
        d = jax.devices()[0]
        v = getattr(d, "num_cores", None)
        if isinstance(v, int) and v > 0:
            return v
        kind = str(getattr(d, "device_kind", "")).lower()
        if "7x" in kind or "v7" in kind:
            return 2
    except Exception:
        pass
    return 1


def _choose_tile_rows(num_rows, num_experts, in_itemsize, num_cores,
                      total_in_bytes):
    """Pick TR (rows of 128 lanes per grid step).

    - capped so 2 inputs x 2 buffers + 2 output buffers stay under the VMEM
      budget (multi-MiB steps -> per-step overhead amortized),
    - TR must divide R and satisfy the (8,128) block constraint
      (TR % 8 == 0 or TR == R),
    - single step for single-TC chips / small problems; >= 2*num_cores steps
      preferred on multi-TC chips so every core gets pipelined work.
    """
    per_row = (2 * 2 * num_experts * 128 * in_itemsize   # two inputs, dbl-buf
               + 2 * 2 * 128 * 4)                        # (2, TR, 128) f32 out
    cap = max(1, _VMEM_BUDGET_BYTES // per_row)
    cap = min(cap, num_rows)

    divs = sorted({d for i in range(1, int(num_rows ** 0.5) + 1)
                   if num_rows % i == 0
                   for d in (i, num_rows // i)})
    valid = [d for d in divs if d <= cap and (d % 8 == 0 or d == num_rows)]
    if not valid:
        # No legal sub-tile under budget: fall back to the (always legal)
        # full-array block; vmem_limit_bytes is sized from the chosen tile.
        return num_rows

    small = total_in_bytes < _SMALL_PROBLEM_BYTES
    if num_cores <= 1 or small:
        return max(valid)

    # Multi-TC (v7x): prefer >= 2 steps per core (pipeline ramp per core),
    # else >= 1 step per core, else take the largest legal tile.
    for min_steps in (2 * num_cores, num_cores):
        cand = [d for d in valid if num_rows // d >= min_steps]
        if cand:
            return max(cand)
    return max(valid)


def _rbcm_kernel(m_ref, v_ref, out_ref, *, log_prior_v, inv_prior_v,
                 num_experts):
    # m_ref, v_ref: (K, TR, 128) blocks — expert means / variances
    # out_ref:      (2, TR, 128) block — row 0 = fused mean, row 1 = variance
    m = m_ref[...].astype(jnp.float32)
    v = v_ref[...].astype(jnp.float32)

    # Exactly one reciprocal and one log per input element (EUP stays well
    # below the HBM roofline); the reciprocal is reused for both accumulators.
    inv_v = 1.0 / v                                     # (K, TR, 128)
    log_v = jnp.log(v)
    log_v = jnp.where(jnp.isnan(log_v), 0.001, log_v)   # torch NaN -> 0.001

    # Leading-axis reductions: K-1 plain VPU adds per element (no XLU).
    sum_log_v = jnp.sum(log_v, axis=0)                  # (TR, 128)
    gp_m = jnp.sum(m * inv_v, axis=0)                   # (TR, 128)
    gp_v = jnp.sum(inv_v, axis=0)                       # (TR, 128)

    # sum_k beta_k = 0.5 * (K * log_prior_v - sum_k log_v_k); all prior_v
    # terms are trace-time scalars, so the correction divide is a scalar mul.
    sum_beta = 0.5 * (num_experts * log_prior_v - sum_log_v)
    correction = (1.0 - sum_beta) * inv_prior_v

    gp_v = 1.0 / (gp_v + correction)
    gp_m = gp_v * gp_m

    out_ref[0] = gp_m                                   # direct row stores,
    out_ref[1] = gp_v                                   # no concat/relayout


def rbcm_predictive_layer(gps_m, gps_v, *, signal_variance=SIGNAL_VARIANCE,
                          tile_rows=None, column_output=True):
    """Fuse K expert GP predictions with the robust-BCM rule.

    gps_m, gps_v: arrays of shape (K, N, 1)   (stacked torch (N,1) columns).
      bf16 inputs are encouraged (kernel is HBM-bound; upcast happens
      in-kernel), f32 also accepted.
    Returns (gp_m, gp_v) as float32; shape (N, 1) when column_output=True
    (torch convention), otherwise (N,) to skip the 1-lane-wide relayout.
    """
    K, N, _ = gps_m.shape
    assert gps_v.shape == gps_m.shape
    # TODO(synk): arbitrary N (as torch allows) needs a pad/mask path
    # (pad with v=+inf so padded lanes contribute 0 to every sum).
    assert N % 128 == 0, "N must be a multiple of the lane width (128)"
    R = N // 128

    in_itemsize = max(jnp.dtype(gps_m.dtype).itemsize,
                      jnp.dtype(gps_v.dtype).itemsize)
    total_in_bytes = 2 * K * N * in_itemsize

    if tile_rows is None:
        tile_rows = _choose_tile_rows(R, K, in_itemsize, _num_tensorcores(),
                                      total_in_bytes)
    assert R % tile_rows == 0 and (tile_rows % 8 == 0 or tile_rows == R)

    # (K, N, 1) -> (K, R, 128): contiguous, free.  Experts on the leading
    # (non-tiled) axis, fully packed (sublane, lane) = (rows, 128) vreg tiles.
    m_k3 = gps_m[..., 0].reshape(K, R, 128)
    v_k3 = gps_v[..., 0].reshape(K, R, 128)

    # prior_v = signal_variance > 0 for an RBF kernel, so the torch NaN guard
    # on log_prior_v is dead; fold everything to trace-time scalars.
    log_prior_v = math.log(signal_variance)
    inv_prior_v = 1.0 / signal_variance

    kernel = functools.partial(
        _rbcm_kernel,
        log_prior_v=log_prior_v,
        inv_prior_v=inv_prior_v,
        num_experts=float(K),
    )

    # Scoped-VMEM limit sized from the actual double-buffered blocks (v5e's
    # default is only 16 MiB); clamped under v7x's 64 MiB physical VMEM.
    block_bytes = (2 * 2 * K * tile_rows * 128 * in_itemsize
                   + 2 * 2 * tile_rows * 128 * 4)
    vmem_limit = int(min(64 << 20,
                         max(32 << 20, block_bytes * 3 // 2 + (1 << 20))))

    grid = (R // tile_rows,)
    out = pl.pallas_call(
        kernel,
        out_shape=jax.ShapeDtypeStruct((2, R, 128), jnp.float32),
        grid_spec=pltpu.PrefetchScalarGridSpec(
            num_scalar_prefetch=0,
            grid=grid,
            in_specs=[
                pl.BlockSpec((K, tile_rows, 128), lambda i: (0, i, 0)),
                pl.BlockSpec((K, tile_rows, 128), lambda i: (0, i, 0)),
            ],
            out_specs=pl.BlockSpec((2, tile_rows, 128), lambda i: (0, i, 0)),
        ),
        compiler_params=pltpu.CompilerParams(
            dimension_semantics=("parallel",),
            vmem_limit_bytes=vmem_limit),
    )(m_k3, v_k3)

    gp_m = out[0].reshape(N)
    gp_v = out[1].reshape(N)
    if column_output:
        # torch's (N, 1) column-vector convention (costs a 1-lane relayout;
        # pass column_output=False if downstream accepts flat vectors).
        return gp_m.reshape(N, 1), gp_v.reshape(N, 1)
    return gp_m, gp_v


def rbcm_forward():
    # PyTorch RobustBayesianCM.forward() literally returns 1.0 (no tensor work).
    return 1.0


def _reference_predictive_layer(gps_m, gps_v, signal_variance):
    """Pure-JAX reference mirroring the torch code line-by-line."""
    K, N, _ = gps_m.shape
    prior_v = jnp.full((N, 1), signal_variance, dtype=jnp.float32)
    log_prior_v = jnp.log(prior_v)
    log_prior_v = jnp.where(jnp.isnan(log_prior_v), 0.001, log_prior_v)
    gp_m = jnp.zeros((N, 1), jnp.float32)
    gp_v = jnp.zeros((N, 1), jnp.float32)
    correction = jnp.zeros((N, 1), jnp.float32)
    for k in range(K):
        m_k = gps_m[k].astype(jnp.float32)
        v_k = gps_v[k].astype(jnp.float32)
        log_v_k = jnp.log(v_k)
        log_v_k = jnp.where(jnp.isnan(log_v_k), 0.001, log_v_k)
        beta_k = 0.5 * (log_prior_v - log_v_k)
        correction = correction + beta_k
        gp_m = gp_m + m_k / v_k
        gp_v = gp_v + 1.0 / v_k
    correction = (1.0 - correction) / prior_v
    gp_v = 1.0 / (gp_v + correction)
    gp_m = gp_v * gp_m
    return gp_m, gp_v


if __name__ == "__main__":
    # Small synthetic committee: K = 4 experts, N = 1024 test points, 1-D
    # output.  Small-problem path -> single grid step (grid = (1,)).
    K, N = 4, 1024
    key = jax.random.PRNGKey(0)
    k_m, k_v = jax.random.split(key)

    # Expert means ~ N(0,1); expert variances strictly positive.
    gps_m = jax.random.normal(k_m, (K, N, 1), dtype=jnp.float32)
    gps_v = 0.05 + jax.nn.softplus(
        jax.random.normal(k_v, (K, N, 1), dtype=jnp.float32))

    # forward() semantics
    assert rbcm_forward() == 1.0

    gp_m, gp_v = rbcm_predictive_layer(gps_m, gps_v)
    gp_m, gp_v = jax.block_until_ready((gp_m, gp_v))

    ref_m, ref_v = _reference_predictive_layer(gps_m, gps_v, SIGNAL_VARIANCE)
    assert gp_m.shape == (N, 1) and gp_v.shape == (N, 1)
    assert jnp.allclose(gp_m, ref_m, rtol=1e-5, atol=1e-5)
    assert jnp.allclose(gp_v, ref_v, rtol=1e-5, atol=1e-5)

    # Second tiny case (N = 256) exercising the smallest legal tile (TR = R).
    gps_m2 = gps_m[:, :256]
    gps_v2 = gps_v[:, :256]
    gp_m2, gp_v2 = jax.block_until_ready(
        rbcm_predictive_layer(gps_m2, gps_v2))
    ref_m2, ref_v2 = _reference_predictive_layer(gps_m2, gps_v2,
                                                 SIGNAL_VARIANCE)
    assert jnp.allclose(gp_m2, ref_m2, rtol=1e-5, atol=1e-5)
    assert jnp.allclose(gp_v2, ref_v2, rtol=1e-5, atol=1e-5)

    # bf16 input path (recommended: halves HBM traffic; upcast is in-kernel).
    gps_m_bf = gps_m.astype(jnp.bfloat16)
    gps_v_bf = gps_v.astype(jnp.bfloat16)
    gp_m3, gp_v3 = jax.block_until_ready(
        rbcm_predictive_layer(gps_m_bf, gps_v_bf, column_output=False))
    ref_m3, ref_v3 = _reference_predictive_layer(gps_m_bf, gps_v_bf,
                                                 SIGNAL_VARIANCE)
    assert gp_m3.shape == (N,) and gp_v3.shape == (N,)
    assert jnp.allclose(gp_m3, ref_m3[:, 0], rtol=1e-5, atol=1e-5)
    assert jnp.allclose(gp_v3, ref_v3[:, 0], rtol=1e-5, atol=1e-5)

    # TODO(synk): sub-model GP `predictive` (Cholesky solve of K_nn + sigma^2 I)
    # has no clean Pallas equivalent here and is modeled by the (gps_m, gps_v)
    # inputs, matching the module's `predictive_layer` path.
    print("KERNEL_OK")
</pallas_src>

<mosaic_0001>
module attributes {stable_mosaic.version = 11 : i64} {
  func.func @_rbcm_kernel(%arg0: i32, %arg1: memref<4x8x128xf32, #tpu.memory_space<vmem>>, %arg2: memref<4x8x128xf32, #tpu.memory_space<vmem>>, %arg3: memref<2x8x128xf32, #tpu.memory_space<vmem>>) attributes {dimension_semantics = [#tpu.dimension_semantics<parallel>], iteration_bounds = array<i64: 1>, scalar_prefetch = 0 : i64, scratch_operands = 0 : i64, tpu.core_type = #tpu.core_type<tc>, window_params = [{transform_indices = @transform_0, window_bounds = array<i64: 4, 8, 128>}, {transform_indices = @transform_1, window_bounds = array<i64: 4, 8, 128>}, {transform_indices = @transform_2, window_bounds = array<i64: 2, 8, 128>}]} {
    %c0 = arith.constant 0 : index
    %c0_0 = arith.constant 0 : index
    %c0_1 = arith.constant 0 : index
    %0 = vector.load %arg1[%c0, %c0_0, %c0_1] : memref<4x8x128xf32, #tpu.memory_space<vmem>>, vector<4x8x128xf32>
    %c0_2 = arith.constant 0 : index
    %c0_3 = arith.constant 0 : index
    %c0_4 = arith.constant 0 : index
    %1 = vector.load %arg2[%c0_2, %c0_3, %c0_4] : memref<4x8x128xf32, #tpu.memory_space<vmem>>, vector<4x8x128xf32>
    %cst = arith.constant 1.000000e+00 : f32
    %2 = vector.broadcast %cst : f32 to vector<4x8x128xf32>
    %3 = arith.divf %2, %1 : vector<4x8x128xf32>
    %4 = math.log %1 : vector<4x8x128xf32>
    %5 = arith.cmpf one, %4, %4 : vector<4x8x128xf32>
    %cst_5 = arith.constant 1.000000e-03 : f32
    %6 = vector.broadcast %cst_5 : f32 to vector<4x8x128xf32>
    %7 = arith.select %5, %6, %4 : vector<4x8x128xi1>, vector<4x8x128xf32>
    %cst_6 = arith.constant dense<0.000000e+00> : vector<8x128xf32>
    %8 = vector.multi_reduction <add>, %7, %cst_6 [0] : vector<4x8x128xf32> to vector<8x128xf32>
    %9 = arith.mulf %0, %3 : vector<4x8x128xf32>
    %cst_7 = arith.constant dense<0.000000e+00> : vector<8x128xf32>
    %10 = vector.multi_reduction <add>, %9, %cst_7 [0] : vector<4x8x128xf32> to vector<8x128xf32>
    %cst_8 = arith.constant dense<0.000000e+00> : vector<8x128xf32>
    %11 = vector.multi_reduction <add>, %3, %cst_8 [0] : vector<4x8x128xf32> to vector<8x128xf32>
    %cst_9 = arith.constant 1.62186038 : f32
    %12 = vector.broadcast %cst_9 : f32 to vector<8x128xf32>
    %13 = arith.subf %12, %8 : vector<8x128xf32>
    %cst_10 = arith.constant 5.000000e-01 : f32
    %14 = vector.broadcast %cst_10 : f32 to vector<8x128xf32>
    %15 = arith.mulf %14, %13 : vector<8x128xf32>
    %cst_11 = arith.constant 1.000000e+00 : f32
    %16 = vector.broadcast %cst_11 : f32 to vector<8x128xf32>
    %17 = arith.subf %16, %15 : vector<8x128xf32>
    %cst_12 = arith.constant 0.666666686 : f32
    %18 = vector.broadcast %cst_12 : f32 to vector<8x128xf32>
    %19 = arith.mulf %17, %18 : vector<8x128xf32>
    %20 = arith.addf %11, %19 : vector<8x128xf32>
    %cst_13 = arith.constant 1.000000e+00 : f32
    %21 = vector.broadcast %cst_13 : f32 to vector<8x128xf32>
    %22 = arith.divf %21, %20 : vector<8x128xf32>
    %23 = arith.mulf %22, %10 : vector<8x128xf32>
    %c0_14 = arith.constant 0 : index
    %c0_15 = arith.constant 0 : index
    %c0_16 = arith.constant 0 : index
    %24 = vector.load %arg3[%c0_14, %c0_15, %c0_16] : memref<2x8x128xf32, #tpu.memory_space<vmem>>, vector<1x8x128xf32>
    %25 = vector.shape_cast %24 : vector<1x8x128xf32> to vector<8x128xf32>
    %26 = vector.shape_cast %23 : vector<8x128xf32> to vector<1x8x128xf32>
    tpu.vector_store %arg3[%c0_14, %c0_15, %c0_16], %26 {strides = array<i32>} : memref<2x8x128xf32, #tpu.memory_space<vmem>>, vector<1x8x128xf32>,
    %c1 = arith.constant 1 : index
    %c0_17 = arith.constant 0 : index
    %c0_18 = arith.constant 0 : index
    %27 = vector.load %arg3[%c1, %c0_17, %c0_18] : memref<2x8x128xf32, #tpu.memory_space<vmem>>, vector<1x8x128xf32>
    %28 = vector.shape_cast %27 : vector<1x8x128xf32> to vector<8x128xf32>
    %29 = vector.shape_cast %22 : vector<8x128xf32> to vector<1x8x128xf32>
    tpu.vector_store %arg3[%c1, %c0_17, %c0_18], %29 {strides = array<i32>} : memref<2x8x128xf32, #tpu.memory_space<vmem>>, vector<1x8x128xf32>,
    return
  }
  func.func @transform_0(%arg0: i32) -> (i32, i32, i32) {
    %c0_i32 = arith.constant 0 : i32
    %c0_i32_0 = arith.constant 0 : i32
    %c0_i32_1 = arith.constant 0 : i32
    return %c0_i32, %arg0, %c0_i32_0 : i32, i32, i32
  }
  func.func @transform_1(%arg0: i32) -> (i32, i32, i32) {
    %c0_i32 = arith.constant 0 : i32
    %c0_i32_0 = arith.constant 0 : i32
    %c0_i32_1 = arith.constant 0 : i32
    return %c0_i32, %arg0, %c0_i32_0 : i32, i32, i32
  }
  func.func @transform_2(%arg0: i32) -> (i32, i32, i32) {
    %c0_i32 = arith.constant 0 : i32
    %c0_i32_0 = arith.constant 0 : i32
    %c0_i32_1 = arith.constant 0 : i32
    return %c0_i32, %arg0, %c0_i32_0 : i32, i32, i32
  }
}

</mosaic_0001>

<llo_original>
// kernel: tpu_custom_call.1
$region0: #{tpu_custom_call.1}
  #allocation0 [shape = 'u32[]', space=smem, size = 0x4, offset = 0x4, fixed_abs, tag = 'smem constant byte address 0x4 - core index']
  #allocation1 [shape = 'u32[144,128]{1,0:T(1,128)}', space=vmem, size = 0x12000, scoped, tag = 'internal scratch']
  %s0 = inlined_call_operand.hbm [shape: f32[4,8,128], index: 0, kind: input, shape index: {}]
  %s1 = inlined_call_operand.hbm [shape: f32[4,8,128], index: 1, kind: input, shape index: {}]
  %s2 = inlined_call_operand.hbm [shape: f32[2,8,128], index: 2, kind: output, shape index: {}]
  %s3 = sld [smem:[#allocation0]]
  $region26: #{tpu_custom_call.1} parent=0
    _
  %s5 = ssub.s32 1, %s3
  %s6 = scalar_select 0, %s5, %s3
  $region1: #{tpu_custom_call.1} parent=0
    #allocation2 [shape = 'u8[16384]{0}', space=vmem, size = 0x4000, scoped, tag = 'input window, operand 0, single buffered']
    #allocation3 [shape = 's32[1]{0}', space=sflag, size = 0x4, scoped, tag = 'scoped memory for tpu_custom_call.1']
    #allocation4 [shape = 's32[1]{0}', space=sflag, size = 0x4, scoped, tag = 'scoped memory for tpu_custom_call.1']
    #allocation5 [shape = 'u8[16384]{0}', space=vmem, size = 0x4000, scoped, tag = 'input window, operand 1, single buffered']
    #allocation6 [shape = 's32[1]{0}', space=sflag, size = 0x4, scoped, tag = 'scoped memory for tpu_custom_call.1']
    #allocation7 [shape = 'u8[8192]{0}', space=vmem, size = 0x2000, scoped, tag = 'output window, operand 0, single buffered']
    %7 = vsyncpa [#allocation3], 0
    %8 = vsyncpa [#allocation6], 0
    %9 = vsyncpa [#allocation4], 0
    // Predicated region
    $region2: #{tpu_custom_call.1} parent=1 // pred_check
      _
    $region3: #{tpu_custom_call.1} parent=1 // pred_check_branch
      %11 = sbr.rel (0) target = $region5
    $region4: #{tpu_custom_call.1} parent=1 // pred_region
      %s13 = ssub.s32 512, 512
      %14 = vsyncadd [#allocation3], %s13
      %s15 = sshll.u32 [#allocation2], 4
      %s16 = int_to_ptr.vmem [resolvable:$true] %s15
      %21 = dma.hbm_to_vmem [thread:$0]  %s0, 512, %s16, [#allocation3], 128, 128, 8
    $region5: #{tpu_custom_call.1} parent=1 // pred_fallthru
      _
    // Predicated region
    $region6: #{tpu_custom_call.1} parent=1 // pred_check
      _
    $region7: #{tpu_custom_call.1} parent=1 // pred_check_branch
      %23 = sbr.rel (0) target = $region9
    $region8: #{tpu_custom_call.1} parent=1 // pred_region
      %s25 = ssub.s32 512, 512
      %26 = vsyncadd [#allocation6], %s25
      %s27 = sshll.u32 [#allocation5], 4
      %s28 = int_to_ptr.vmem [resolvable:$true] %s27
      %33 = dma.hbm_to_vmem [thread:$0]  %s1, 512, %s28, [#allocation6], 128, 128, 8
    $region9: #{tpu_custom_call.1} parent=1 // pred_fallthru
      _
    // Predicated region
    $region10: #{tpu_custom_call.1} parent=1 // pred_check
      _
    $region11: #{tpu_custom_call.1} parent=1 // pred_check_branch
      %35 = sbr.rel (0) target = $region13
    $region12: #{tpu_custom_call.1} parent=1 // pred_region
      %36 = dma.done [#allocation3], 512
    $region13: #{tpu_custom_call.1} parent=1 // pred_fallthru
      _
    // Predicated region
    $region14: #{tpu_custom_call.1} parent=1 // pred_check
      _
    $region15: #{tpu_custom_call.1} parent=1 // pred_check_branch
      %38 = sbr.rel (0) target = $region17
    $region16: #{tpu_custom_call.1} parent=1 // pred_region
      %39 = dma.done [#allocation6], 512
    $region17: #{tpu_custom_call.1} parent=1 // pred_fallthru
      _
    %v40 = vld [vmem:[#allocation2] sm:$0xff]
    %v41 = vld [vmem:[#allocation2 + $0x8] sm:$0xff]
    %v42 = vld [vmem:[#allocation2 + $0x10] sm:$0xff]
    %v43 = vld [vmem:[#allocation2 + $0x18] sm:$0xff]
    %v44 = vld [vmem:[#allocation5] sm:$0xff]
    %v45 = vld [vmem:[#allocation5 + $0x8] sm:$0xff]
    %v46 = vld [vmem:[#allocation5 + $0x10] sm:$0xff]
    %v47 = vld [vmem:[#allocation5 + $0x18] sm:$0xff]
    %v48 = vrcp.pop %v44
    %v49 = vmul.f32 1.0, %v48
    %v50 = vrcp.pop %v45
    %v51 = vmul.f32 1.0, %v50
    %v52 = vrcp.pop %v46
    %v53 = vmul.f32 1.0, %v52
    %v54 = vrcp.pop %v47
    %v55 = vmul.f32 1.0, %v54
    %v56 = vlog2.pop %v44
    %v57 = vmul.f32 %v56, 0.6931472
    %v58 = vlog2.pop %v45
    %v59 = vmul.f32 %v58, 0.6931472
    %v60 = vlog2.pop %v46
    %v61 = vmul.f32 %v60, 0.6931472
    %v62 = vlog2.pop %v47
    %v63 = vmul.f32 %v62, 0.6931472
    %vm64 = vcmp.ne.f32.partialorder %v57, %v57
    %vm65 = vcmp.ne.f32.partialorder %v59, %v59
    %vm66 = vcmp.ne.f32.partialorder %v61, %v61
    %vm67 = vcmp.ne.f32.partialorder %v63, %v63
    %v68 = vsel %vm64, 0.001, %v57
    %v69 = vsel %vm65, 0.001, %v59
    %v70 = vsel %vm66, 0.001, %v61
    %v71 = vsel %vm67, 0.001, %v63
    %v72 = vadd.f32 %v68, %v69
    %v73 = vadd.f32 %v72, %v70
    %v74 = vadd.f32 %v73, %v71
    %v75 = vmul.f32 %v40, %v49
    %v76 = vmul.f32 %v41, %v51
    %v77 = vmul.f32 %v42, %v53
    %v78 = vmul.f32 %v43, %v55
    %v79 = vadd.f32 %v75, %v76
    %v80 = vadd.f32 %v79, %v77
    %v81 = vadd.f32 %v80, %v78
    %v82 = vadd.f32 %v49, %v51
    %v83 = vadd.f32 %v82, %v53
    %v84 = vadd.f32 %v83, %v55
    %v85 = vsub.f32 1.6218604, %v74
    %v86 = vmul.f32 %v85, 0.5
    %v87 = vsub.f32 1.0, %v86
    %v88 = vmul.f32 %v87, 0.6666667
    %v89 = vadd.f32 %v84, %v88
    %v90 = vrcp.pop %v89
    %v91 = vmul.f32 1.0, %v90
    %v92 = vmul.f32 %v91, %v81
    %93 = vst [vmem:[#allocation7] sm:$0xff] %v92
    %s94 = scalar_lea.vmem [#allocation7], 8
    %95 = vst [vmem:[%s94] sm:$0xff] %v91
    // Predicated region
    $region18: #{tpu_custom_call.1} parent=1 // pred_check
      _
    $region19: #{tpu_custom_call.1} parent=1 // pred_check_branch
      %97 = sbr.rel (0) target = $region21
    $region20: #{tpu_custom_call.1} parent=1 // pred_region
      %s99 = ssub.s32 256, 256
      %100 = vsyncadd [#allocation4], %s99
      %s101 = sshll.u32 [#allocation7], 4
      %s102 = int_to_ptr.vmem [resolvable:$true] %s101
      %107 = dma.vmem_to_hbm [thread:$0]  %s102, 256, %s2, [#allocation4], 128, 128, 8
    $region21: #{tpu_custom_call.1} parent=1 // pred_fallthru
      _
    // Predicated region
    $region22: #{tpu_custom_call.1} parent=1 // pred_check
      _
    $region23: #{tpu_custom_call.1} parent=1 // pred_check_branch
      %109 = sbr.rel (0) target = $region25
    $region24: #{tpu_custom_call.1} parent=1 // pred_region
      %110 = dma.done [#allocation4], 256
    $region25: #{tpu_custom_call.1} parent=1 // pred_fallthru
      _
    %111 = vsyncpa [#allocation3], 1
    %112 = vsyncpa [#allocation6], 1
    %113 = vsyncpa [#allocation4], 1

</llo_original>
